<compile_context>
chip_gen: v6e
topology: v6e:2x2x1
jax: 0.10.0
libtpu: 0.0.40
codegen_flags: <defaults>
</compile_context>

<pallas_src>
import functools

import jax
import jax.numpy as jnp
from jax.experimental import pallas as pl
from jax.experimental.pallas import tpu as pltpu

_LANE = 128


def _affine_kernel(a_ref, b_ref, x_ref, o_ref):
    """o = x * a + b on one (tm, tn) tile; a, b are f32 scalars in SMEM."""
    a = a_ref[0, 0]
    b = b_ref[0, 0]
    xv = x_ref[...].astype(jnp.float32)
    o_ref[...] = (xv * a + b).astype(o_ref.dtype)


def _tpu_generation_info():
    """(tensorcores_per_chip, physical_vmem_bytes) with conservative fallbacks."""
    n_tc, vmem_phys = 1, 64 << 20
    try:
        kind = jax.devices()[0].device_kind.lower()
    except Exception:
        kind = ""
    if "v7" in kind:
        n_tc, vmem_phys = 2, 64 << 20
    elif any(g in kind for g in ("v6", "v5", "v4")):
        n_tc, vmem_phys = 1, 128 << 20
    try:  # Prefer the Pallas hardware query when it is available.
        info = pltpu.get_tpu_info()
        v = getattr(info, "vmem_capacity_bytes", None)
        if isinstance(v, int) and v > 0:
            vmem_phys = v
        for attr in ("num_tensorcores", "tensorcore_count", "num_cores"):
            c = getattr(info, attr, None)
            if isinstance(c, int) and c > 0:
                n_tc = c
                break
    except Exception:
        pass
    return n_tc, vmem_phys


def _run_2d(x2, tn, a_smem, b_smem, out_dtype, *, target_tile_bytes,
            vmem_limit_bytes, n_tc):
    """Run the affine kernel over a 2-D (rows, cols) view with column tile tn."""
    rows, cols = x2.shape
    in_it = jnp.dtype(x2.dtype).itemsize
    out_it = jnp.dtype(out_dtype).itemsize
    sublane = {4: 8, 2: 16, 1: 32}.get(in_it, 8)

    # ---- row tile: budget VMEM against BOTH input and output dtypes -------
    # Each pipelined step holds 2 input tiles + 2 output tiles (double
    # buffering): 2 * tm * tn * (in_it + out_it) bytes.
    target_rows = max(1, target_tile_bytes // (tn * in_it))
    vmem_rows = max(1, (vmem_limit_bytes * 3 // 4) // (tn * (in_it + out_it) * 2))
    max_rows = max(sublane, min(target_rows, vmem_rows))
    if max_rows >= rows:
        tm = rows                                  # single row block (full dim)
    else:
        tm = max(sublane, (max_rows // sublane) * sublane)

    # On multi-TensorCore parts make sure there are >= 4 row blocks so each
    # core gets >= 2 pipelined steps (lets DMA overlap compute).  Single-TC
    # parts keep the single big block (no per-step overhead added).
    if (n_tc > 1 and pl.cdiv(rows, tm) < 4 and rows >= 4 * sublane
            and rows * tn * in_it > (1 << 20)):
        tm = max(sublane, ((pl.cdiv(rows, 4) + sublane - 1) // sublane) * sublane)

    grid = (pl.cdiv(rows, tm), pl.cdiv(cols, tn))

    return pl.pallas_call(
        _affine_kernel,
        out_shape=jax.ShapeDtypeStruct((rows, cols), out_dtype),
        grid_spec=pltpu.PrefetchScalarGridSpec(
            num_scalar_prefetch=0,
            grid=grid,
            in_specs=[
                pl.BlockSpec(memory_space=pltpu.SMEM),          # a (1,1) f32
                pl.BlockSpec(memory_space=pltpu.SMEM),          # b (1,1) f32
                pl.BlockSpec((tm, tn), lambda i, j: (i, j)),    # x tile
            ],
            out_specs=pl.BlockSpec((tm, tn), lambda i, j: (i, j)),
        ),
        compiler_params=pltpu.CompilerParams(
            dimension_semantics=("parallel", "parallel"),
            vmem_limit_bytes=vmem_limit_bytes,
        ),
    )(a_smem, b_smem, x2)


def dummy_model_forward(x, a, b, *,
                        target_tile_bytes=8 << 20,     # ~8 MiB input tile
                        vmem_limit_bytes=48 << 20):    # scoped VMEM (capped below)
    """y = x * a + b, where a and b are scalar parameters (shape (1,))."""
    orig_shape = x.shape
    out_dtype = jnp.result_type(x.dtype, a.dtype, b.dtype)
    total = x.size

    n_tc, vmem_phys = _tpu_generation_info()
    # Stay well under physical VMEM (v7x has only 64 MiB per TensorCore).
    vmem_limit = int(min(vmem_limit_bytes, max(32 << 20, vmem_phys - (16 << 20))))

    # Scalars stay float32 in SMEM (32-bit scalar space); kernel computes in
    # f32 and casts on store, matching PyTorch type promotion.
    a_smem = jnp.reshape(a, (1, 1)).astype(jnp.float32)
    b_smem = jnp.reshape(b, (1, 1)).astype(jnp.float32)

    if total == 0:
        return jnp.zeros(orig_shape, out_dtype)

    run = functools.partial(_run_2d, a_smem=a_smem, b_smem=b_smem,
                            out_dtype=out_dtype,
                            target_tile_bytes=target_tile_bytes,
                            vmem_limit_bytes=vmem_limit, n_tc=n_tc)

    if total % _LANE == 0:
        # ---- lane-dense flat repack (free for an elementwise op) ----
        tn = _LANE
        for w in (2048, 1024, 512, 384, 256):
            if total % w == 0:
                tn = w
                break
        y2 = run(x.reshape(total // tn, tn), tn)
        return y2.reshape(orig_shape)

    if x.ndim >= 2 and x.shape[-1] >= _LANE:
        # Ragged total but wide last dim: keep the natural (rows, cols) view.
        # Bulk column blocks are 128-multiples (unmasked vst); only the last
        # column block is masked.
        cols = x.shape[-1]
        tn = min(2048, (cols // _LANE) * _LANE)
        y2 = run(x.reshape(-1, cols), tn)
        return y2.reshape(orig_shape)

    # Skinny ragged case (1-D, or last dim < 128 with non-128-multiple size):
    # run the 128-aligned prefix through the lane-dense kernel and handle the
    # < 128-element tail with plain jnp — avoids the degenerate (1, N) tile.
    flat = x.reshape(-1)
    a_s = a_smem[0, 0]
    b_s = b_smem[0, 0]
    prefix = (total // _LANE) * _LANE
    if prefix == 0:
        y = (flat.astype(jnp.float32) * a_s + b_s).astype(out_dtype)
        return y.reshape(orig_shape)
    tn = _LANE
    for w in (2048, 1024, 512, 256):
        if prefix % w == 0:
            tn = w
            break
    head = run(flat[:prefix].reshape(prefix // tn, tn), tn).reshape(-1)
    tail = (flat[prefix:].astype(jnp.float32) * a_s + b_s).astype(out_dtype)
    return jnp.concatenate([head, tail]).reshape(orig_shape)


if __name__ == "__main__":
    key = jax.random.PRNGKey(0)
    kx, ka, kb, kx2, kx3 = jax.random.split(key, 5)

    # Deterministic "randn(1)" parameters, as in the PyTorch module.
    a = jax.random.normal(ka, (1,), dtype=jnp.float32)
    b = jax.random.normal(kb, (1,), dtype=jnp.float32)

    # 1) Small, lane-aligned input: batch=16, features=128.
    x = jax.random.normal(kx, (16, 128), dtype=jnp.float32)
    y = jax.block_until_ready(dummy_model_forward(x, a, b))
    y_ref = x * a[0] + b[0]
    assert jnp.allclose(y, y_ref, atol=1e-6, rtol=1e-6), "mismatch (aligned)"

    # 2) Lane-dense repack path with a non-128 last dim (total still 128-mult).
    x_odd = jax.random.normal(kx2, (100, 96), dtype=jnp.float32)
    y_odd = jax.block_until_ready(dummy_model_forward(x_odd, a, b))
    y_odd_ref = x_odd * a[0] + b[0]
    assert jnp.allclose(y_odd, y_odd_ref, atol=1e-6, rtol=1e-6), "mismatch (repack)"

    # 3) Skinny ragged 1-D input (bf16 x, f32 params -> f32 out): prefix+tail path.
    x_1d = jax.random.normal(kx3, (1000,), dtype=jnp.bfloat16)
    y_1d = jax.block_until_ready(dummy_model_forward(x_1d, a, b))
    y_1d_ref = x_1d.astype(jnp.float32) * a[0] + b[0]
    assert y_1d.dtype == jnp.float32
    assert jnp.allclose(y_1d, y_1d_ref, atol=1e-5, rtol=1e-5), "mismatch (ragged 1-D)"

    print("KERNEL_OK")
</pallas_src>

<mosaic_0001>
module attributes {stable_mosaic.version = 11 : i64} {
  func.func @_affine_kernel(%arg0: i32, %arg1: i32, %arg2: memref<1x1xf32, #tpu.memory_space<smem>>, %arg3: memref<1x1xf32, #tpu.memory_space<smem>>, %arg4: memref<1x2048xf32, #tpu.memory_space<vmem>>, %arg5: memref<1x2048xf32, #tpu.memory_space<vmem>>) attributes {dimension_semantics = [#tpu.dimension_semantics<parallel>, #tpu.dimension_semantics<parallel>], iteration_bounds = array<i64: 1, 1>, scalar_prefetch = 0 : i64, scratch_operands = 0 : i64, tpu.core_type = #tpu.core_type<tc>, window_params = [{transform_indices = @transform_0, window_bounds = array<i64: 1, 1>}, {transform_indices = @transform_1, window_bounds = array<i64: 1, 1>}, {transform_indices = @transform_2, window_bounds = array<i64: 1, 2048>}, {transform_indices = @transform_3, window_bounds = array<i64: 1, 2048>}]} {
    %c0 = arith.constant 0 : index
    %c0_0 = arith.constant 0 : index
    %0 = memref.load %arg2[%c0, %c0_0] : memref<1x1xf32, #tpu.memory_space<smem>>
    %c0_1 = arith.constant 0 : index
    %c0_2 = arith.constant 0 : index
    %1 = memref.load %arg3[%c0_1, %c0_2] : memref<1x1xf32, #tpu.memory_space<smem>>
    %c0_3 = arith.constant 0 : index
    %c0_4 = arith.constant 0 : index
    %2 = vector.load %arg4[%c0_3, %c0_4] : memref<1x2048xf32, #tpu.memory_space<vmem>>, vector<1x2048xf32>
    %3 = vector.broadcast %0 : f32 to vector<1x2048xf32>
    %4 = arith.mulf %2, %3 : vector<1x2048xf32>
    %5 = vector.broadcast %1 : f32 to vector<1x2048xf32>
    %6 = arith.addf %4, %5 : vector<1x2048xf32>
    %c0_5 = arith.constant 0 : index
    %c0_6 = arith.constant 0 : index
    %7 = vector.load %arg5[%c0_5, %c0_6] : memref<1x2048xf32, #tpu.memory_space<vmem>>, vector<1x2048xf32>
    tpu.vector_store %arg5[%c0_5, %c0_6], %6 {strides = array<i32>} : memref<1x2048xf32, #tpu.memory_space<vmem>>, vector<1x2048xf32>,
    return
  }
  func.func @transform_0(%arg0: i32, %arg1: i32) -> (i32, i32) {
    %c0_i32 = arith.constant 0 : i32
    %c0_i32_0 = arith.constant 0 : i32
    %c0_i32_1 = arith.constant 0 : i32
    return %c0_i32, %c0_i32_0 : i32, i32
  }
  func.func @transform_1(%arg0: i32, %arg1: i32) -> (i32, i32) {
    %c0_i32 = arith.constant 0 : i32
    %c0_i32_0 = arith.constant 0 : i32
    %c0_i32_1 = arith.constant 0 : i32
    return %c0_i32, %c0_i32_0 : i32, i32
  }
  func.func @transform_2(%arg0: i32, %arg1: i32) -> (i32, i32) {
    %c0_i32 = arith.constant 0 : i32
    return %arg0, %arg1 : i32, i32
  }
  func.func @transform_3(%arg0: i32, %arg1: i32) -> (i32, i32) {
    %c0_i32 = arith.constant 0 : i32
    return %arg0, %arg1 : i32, i32
  }
}

</mosaic_0001>

<llo_original>
// kernel: tpu_custom_call.1
$region0: #{tpu_custom_call.1}
  #allocation0 [shape = 'u32[]', space=smem, size = 0x4, offset = 0x4, fixed_abs, tag = 'smem constant byte address 0x4 - core index']
  #allocation1 [shape = 'u32[144,128]{1,0:T(1,128)}', space=vmem, size = 0x12000, scoped, tag = 'internal scratch']
  #allocation2 [shape = 'f32[1,1]{1,0:T(1,128)S(6)}', space=smem, size = 0x200, scoped, tag = 'scoped memory for tpu_custom_call.1']
  #allocation3 [shape = 'f32[1,1]{1,0:T(1,128)S(6)}', space=smem, size = 0x200, scoped, tag = 'scoped memory for tpu_custom_call.1']
  %s0 = inlined_call_operand.<no memory space> [shape: f32[1,1], index: 0, kind: input, shape index: {}]
  %s1 = inlined_call_operand.<no memory space> [shape: f32[1,1], index: 1, kind: input, shape index: {}]
  %s2 = inlined_call_operand.hbm [shape: f32[1,2048], index: 2, kind: input, shape index: {}]
  %s3 = inlined_call_operand.hbm [shape: f32[1,2048], index: 3, kind: output, shape index: {}]
  %s4 = sld [smem:[#allocation0]]
  $region26: #{tpu_custom_call.1} parent=0
    _
  %s6 = ssub.s32 1, %s4
  %s7 = scalar_select 0, %s6, %s4
  %8 = sst [smem:[#allocation2]] %s0
  %9 = sst [smem:[#allocation3]] %s1
  $region1: #{tpu_custom_call.1} parent=0
    #allocation4 [shape = 'u8[8192]{0}', space=vmem, size = 0x2000, scoped, tag = 'input window, operand 2, single buffered']
    #allocation5 [shape = 's32[1]{0}', space=sflag, size = 0x4, scoped, tag = 'scoped memory for tpu_custom_call.1']
    #allocation6 [shape = 's32[1]{0}', space=sflag, size = 0x4, scoped, tag = 'scoped memory for tpu_custom_call.1']
    #allocation7 [shape = 'u8[8192]{0}', space=vmem, size = 0x2000, scoped, tag = 'output window, operand 0, single buffered']
    %10 = vsyncpa [#allocation5], 0
    %11 = vsyncpa [#allocation6], 0
    // Predicated region
    $region2: #{tpu_custom_call.1} parent=1 // pred_check
      _
    $region3: #{tpu_custom_call.1} parent=1 // pred_check_branch
      %13 = sbr.rel (0) target = $region5
    $region4: #{tpu_custom_call.1} parent=1 // pred_region
      _
    $region5: #{tpu_custom_call.1} parent=1 // pred_fallthru
      _
    // Predicated region
    $region6: #{tpu_custom_call.1} parent=1 // pred_check
      _
    $region7: #{tpu_custom_call.1} parent=1 // pred_check_branch
      %15 = sbr.rel (0) target = $region9
    $region8: #{tpu_custom_call.1} parent=1 // pred_region
      _
    $region9: #{tpu_custom_call.1} parent=1 // pred_fallthru
      _
    // Predicated region
    $region10: #{tpu_custom_call.1} parent=1 // pred_check
      _
    $region11: #{tpu_custom_call.1} parent=1 // pred_check_branch
      %17 = sbr.rel (0) target = $region13
    $region12: #{tpu_custom_call.1} parent=1 // pred_region
      %s19 = ssub.s32 256, 256
      %20 = vsyncadd [#allocation5], %s19
      %s22 = sshll.u32 [#allocation4], 4
      %s23 = int_to_ptr.vmem [resolvable:$true] %s22
      %25 = dma.hbm_to_vmem [thread:$0]  %s2, 256, %s23, [#allocation5]
    $region13: #{tpu_custom_call.1} parent=1 // pred_fallthru
      _
    // Predicated region
    $region14: #{tpu_custom_call.1} parent=1 // pred_check
      _
    $region15: #{tpu_custom_call.1} parent=1 // pred_check_branch
      %27 = sbr.rel (0) target = $region17
    $region16: #{tpu_custom_call.1} parent=1 // pred_region
      %28 = dma.done [#allocation5], 256
    $region17: #{tpu_custom_call.1} parent=1 // pred_fallthru
      _
    %s29 = sld [smem:[#allocation2]]
    %s30 = sld [smem:[#allocation3]]
    %v31 = vld [vmem:[#allocation4] sm:$0xff]
    %v32 = vld [vmem:[#allocation4 + $0x8] sm:$0xff]
    %v33 = vstv %s29
    %v34 = vmul.f32 %v31, %v33
    %v35 = vmul.f32 %v32, %v33
    %v36 = vstv %s30
    %v37 = vadd.f32 %v34, %v36
    %v38 = vadd.f32 %v35, %v36
    %39 = vst [vmem:[#allocation7] sm:$0xff] %v37
    %40 = vst [vmem:[#allocation7 + $0x8] sm:$0xff] %v38
    // Predicated region
    $region18: #{tpu_custom_call.1} parent=1 // pred_check
      _
    $region19: #{tpu_custom_call.1} parent=1 // pred_check_branch
      %42 = sbr.rel (0) target = $region21
    $region20: #{tpu_custom_call.1} parent=1 // pred_region
      %s44 = ssub.s32 256, 256
      %45 = vsyncadd [#allocation6], %s44
      %s47 = sshll.u32 [#allocation7], 4
      %s48 = int_to_ptr.vmem [resolvable:$true] %s47
      %50 = dma.vmem_to_hbm [thread:$0]  %s48, 256, %s3, [#allocation6]
    $region21: #{tpu_custom_call.1} parent=1 // pred_fallthru
      _
    // Predicated region
    $region22: #{tpu_custom_call.1} parent=1 // pred_check
      _
    $region23: #{tpu_custom_call.1} parent=1 // pred_check_branch
      %52 = sbr.rel (0) target = $region25
    $region24: #{tpu_custom_call.1} parent=1 // pred_region
      %53 = dma.done [#allocation6], 256
    $region25: #{tpu_custom_call.1} parent=1 // pred_fallthru
      _
    %54 = vsyncpa [#allocation5], 1
    %55 = vsyncpa [#allocation6], 1

</llo_original>
